<compile_context>
chip_gen: v7x
topology: tpu7x:2x2x1
jax: 0.10.0
libtpu: 0.0.40
codegen_flags: <defaults>
</compile_context>

<pallas_src>
import jax
import jax.numpy as jnp
from jax.experimental import pallas as pl
from jax.experimental.pallas import tpu as pltpu


# --------------------------------------------------------------------- kernel
def _make_kernel(meta):
    o = meta["offsets"]
    z_dim, a_dim = meta["z_dim"], meta["a_dim"]
    H = meta["H"]                                 # n_nets * hidden (fused width)
    Q = meta["n_nets"] * meta["n_quantiles"]      # fused output width
    f32, bf16 = jnp.float32, jnp.bfloat16

    def kernel(z_ref, a_ref, slab_ref, out_ref):
        # Layer 1: z-part + action-part (removes the wrapper-side concat).
        h = (jnp.dot(z_ref[...].astype(bf16),
                     slab_ref[o["w1z"]:o["w1z"] + z_dim, :H],
                     preferred_element_type=f32)
             + jnp.dot(a_ref[...].astype(bf16),
                       slab_ref[o["w1a"]:o["w1a"] + a_dim, :H],
                       preferred_element_type=f32)
             + slab_ref[o["b1"]:o["b1"] + 1, :H].astype(f32))
        h = jnp.maximum(h, 0.0)

        # Layers 2/3: block-diagonal (H, H); lane-dense when H is a multiple of 128.
        h = (jnp.dot(h.astype(bf16), slab_ref[o["w2"]:o["w2"] + H, :H],
                     preferred_element_type=f32)
             + slab_ref[o["b2"]:o["b2"] + 1, :H].astype(f32))
        h = jnp.maximum(h, 0.0)

        h = (jnp.dot(h.astype(bf16), slab_ref[o["w3"]:o["w3"] + H, :H],
                     preferred_element_type=f32)
             + slab_ref[o["b3"]:o["b3"] + 1, :H].astype(f32))
        h = jnp.maximum(h, 0.0)

        # Layer 4: block-diagonal (H, n_nets*n_quantiles), net-major columns so a
        # plain row-major reshape reproduces torch.stack(dim=1).
        q = (jnp.dot(h.astype(bf16), slab_ref[o["w4"]:o["w4"] + H, :Q],
                     preferred_element_type=f32)
             + slab_ref[o["b4"]:o["b4"] + 1, :Q].astype(f32))
        out_ref[...] = q

    return kernel


# -------------------------------------------------------------------- wrapper
def tqc_critic_forward(z, action, slab, meta, *, batch_block=256):
    """z: (B, z_dim) f32, action: (B, action_dim) f32, slab/meta from fuse_params().
    Returns (B, n_nets, n_quantiles), matching torch.stack([net(cat)...], dim=1)."""
    B, z_dim = z.shape
    a_dim = action.shape[1]
    n_nets, nq = meta["n_nets"], meta["n_quantiles"]
    H, Q = meta["H"], meta["n_nets"] * meta["n_quantiles"]
    kernel = _make_kernel(meta)

    cost = pl.CostEstimate(
        flops=2 * B * ((z_dim + a_dim) * H + 2 * H * H + H * Q),
        transcendentals=0,
        bytes_accessed=4 * B * (z_dim + a_dim + Q) + 2 * slab.shape[0] * slab.shape[1],
    )
    out_shape = jax.ShapeDtypeStruct((B, Q), jnp.float32)
    vmem = pltpu.MemorySpace.VMEM

    if B <= batch_block:
        # Grid-free: single kernel invocation, all operands whole-array resident in
        # VMEM, 3 input DMAs total, no pipeline bookkeeping.
        out = pl.pallas_call(
            kernel,
            out_shape=out_shape,
            in_specs=[pl.BlockSpec(memory_space=vmem)] * 3,
            out_specs=pl.BlockSpec(memory_space=vmem),
            cost_estimate=cost,
        )(z, action, slab)
    else:
        # Large-batch path: tile the batch; "parallel" lets megacore (v7x: 2 TCs)
        # split rows while the weight slab stays resident (constant index_map).
        if B % batch_block:
            raise ValueError(f"B={B} must be a multiple of batch_block={batch_block}")
        out = pl.pallas_call(
            kernel,
            out_shape=out_shape,
            grid=(B // batch_block,),
            in_specs=[
                pl.BlockSpec((batch_block, z_dim), lambda i: (i, 0)),
                pl.BlockSpec((batch_block, a_dim), lambda i: (i, 0)),
                pl.BlockSpec(slab.shape, lambda i: (0, 0)),
            ],
            out_specs=pl.BlockSpec((batch_block, Q), lambda i: (i, 0)),
            compiler_params=pltpu.CompilerParams(
                dimension_semantics=("parallel",)),
            cost_estimate=cost,
        )(z, action, slab)

    # TODO(synk): emit (B, n_nets, n_quantiles) directly from the kernel (or fuse the
    # downstream quantile consumer) to drop this last wrapper op; needs verified
    # mid-dim indexed stores on the target Mosaic version. Only a row-major reshape
    # (no slice) remains here.
    return out.reshape(B, n_nets, nq)


# --------------------------------------------------------------------- params
def init_params(key, d_in, hidden, n_quantiles, n_nets):
    """Per-net stacked params; init matches nn.Linear U(-1/sqrt(fan_in), +1/sqrt(fan_in)).
    wK: (n_nets, in, out)   bK: (n_nets, 1, out)"""
    dims = [(d_in, hidden), (hidden, hidden), (hidden, hidden), (hidden, n_quantiles)]
    params = {}
    for li, (fi, fo) in enumerate(dims, start=1):
        key, kw, kb = jax.random.split(key, 3)
        bound = 1.0 / jnp.sqrt(float(fi))
        params[f"w{li}"] = jax.random.uniform(kw, (n_nets, fi, fo), jnp.float32, -bound, bound)
        params[f"b{li}"] = jax.random.uniform(kb, (n_nets, 1, fo), jnp.float32, -bound, bound)
    return params


def fuse_params(params, z_dim, dtype=jnp.bfloat16):
    """One-time pack of all nets' weights/biases into a single (rows, LANES) bf16 slab.

    Row sections (each column-padded to LANES, row starts 16-aligned):
      w1z (z_dim,H) | w1a (a_dim,H) | b1 (1,H) | w2 (H,H) blkdiag | b2 (1,H) |
      w3 (H,H) blkdiag | b3 (1,H) | w4 (H,Q) blkdiag | b4 (1,Q)
    H = n_nets*hidden, Q = n_nets*n_quantiles; columns are net-major.

    NOTE: block-diagonal hidden layers are O(H^2).  If n_nets*hidden grows past
    ~1024-1536, switch to a per-net grid axis over stacked (n_nets, hidden, hidden)
    weights instead (v7x has only 64 MiB VMEM) and set vmem_limit_bytes explicitly.
    """
    n_nets, d_in, hidden = params["w1"].shape
    nq = params["w4"].shape[-1]
    H = n_nets * hidden
    Q = n_nets * nq
    LANES = max(128, ((H + 127) // 128) * 128)
    ALIGN = 16  # bf16 sublane packing

    def block_diag(w):  # (n, hi, ho) -> (n*hi, n*ho)
        n, hi, ho = w.shape
        out = jnp.zeros((n * hi, n * ho), w.dtype)
        for i in range(n):
            out = out.at[i * hi:(i + 1) * hi, i * ho:(i + 1) * ho].set(w[i])
        return out

    w1 = jnp.transpose(params["w1"], (1, 0, 2)).reshape(d_in, H)  # net-major columns
    sections = {
        "w1z": w1[:z_dim],
        "w1a": w1[z_dim:],
        "b1": params["b1"].reshape(1, H),
        "w2": block_diag(params["w2"]),
        "b2": params["b2"].reshape(1, H),
        "w3": block_diag(params["w3"]),
        "b3": params["b3"].reshape(1, H),
        "w4": block_diag(params["w4"]),
        "b4": params["b4"].reshape(1, Q),
    }

    offsets, rows, cursor = {}, [], 0
    for name, arr in sections.items():
        arr = jnp.pad(arr.astype(jnp.float32), ((0, 0), (0, LANES - arr.shape[1])))
        offsets[name] = cursor
        rows.append(arr)
        cursor += arr.shape[0]
        pad = (-cursor) % ALIGN
        if pad:
            rows.append(jnp.zeros((pad, LANES), jnp.float32))
            cursor += pad
    slab = jnp.concatenate(rows, axis=0).astype(dtype)

    # TODO(synk): for repeated target-critic calls with frozen weights, a cross-call
    # weight-resident design (P10: start slab DMA once, hand VMEM ref + semaphore
    # forward) would avoid re-DMA'ing this slab every launch.
    meta = dict(offsets=offsets, z_dim=z_dim, a_dim=d_in - z_dim,
                hidden=hidden, H=H, n_nets=n_nets, n_quantiles=nq)
    return slab, meta


# ------------------------------------------------------------------ reference
def reference_forward(z, action, params):
    cat = jnp.concatenate([z, action], axis=1)
    outs = []
    for n in range(params["w1"].shape[0]):
        h = jnp.maximum(cat @ params["w1"][n] + params["b1"][n], 0.0)
        h = jnp.maximum(h @ params["w2"][n] + params["b2"][n], 0.0)
        h = jnp.maximum(h @ params["w3"][n] + params["b3"][n], 0.0)
        outs.append(h @ params["w4"][n] + params["b4"][n])
    return jnp.stack(outs, axis=1)


# ----------------------------------------------------------------------- main
if __name__ == "__main__":
    B = 8
    z1_dim, z2_dim, action_dim = 16, 16, 4
    hidden = 64            # TQC_hidden_units -> fused hidden width H = n_nets*hidden = 128
    n_quantiles = 25
    n_nets = 2
    z_dim = z1_dim + z2_dim
    d_in = z_dim + action_dim

    key = jax.random.PRNGKey(0)
    kz, ka, kp, kz2, ka2 = jax.random.split(key, 5)
    z = jax.random.normal(kz, (B, z_dim), jnp.float32)
    action = jax.random.uniform(ka, (B, action_dim), jnp.float32, minval=-1.0, maxval=1.0)

    params = init_params(kp, d_in, hidden, n_quantiles, n_nets)
    slab, meta = fuse_params(params, z_dim)

    # Small-batch (grid-free) path.
    q = jax.block_until_ready(tqc_critic_forward(z, action, slab, meta))
    assert q.shape == (B, n_nets, n_quantiles), q.shape
    ref = reference_forward(z, action, params)
    # bf16 weights / bf16 dot operands with f32 accumulation -> loosened tolerance.
    assert jnp.allclose(q, ref, rtol=5e-2, atol=5e-2), float(jnp.max(jnp.abs(q - ref)))

    # Large-batch (batch-tiled, megacore-parallel) path.
    Bb = 512
    zb = jax.random.normal(kz2, (Bb, z_dim), jnp.float32)
    ab = jax.random.uniform(ka2, (Bb, action_dim), jnp.float32, minval=-1.0, maxval=1.0)
    qb = jax.block_until_ready(tqc_critic_forward(zb, ab, slab, meta, batch_block=256))
    assert qb.shape == (Bb, n_nets, n_quantiles), qb.shape
    refb = reference_forward(zb, ab, params)
    assert jnp.allclose(qb, refb, rtol=5e-2, atol=5e-2), float(jnp.max(jnp.abs(qb - refb)))

    print("KERNEL_OK")
</pallas_src>

<mosaic_0001>
module attributes {stable_mosaic.version = 11 : i64} {
  func.func @kernel(%arg0: memref<8x32xf32, #tpu.memory_space<vmem>>, %arg1: memref<8x4xf32, #tpu.memory_space<vmem>>, %arg2: memref<496x128xbf16, #tpu.memory_space<vmem>>, %arg3: memref<8x50xf32, #tpu.memory_space<vmem>>) attributes {dimension_semantics = [], scalar_prefetch = 0 : i64, scratch_operands = 0 : i64, tpu.core_type = #tpu.core_type<tc>} {
    %c0 = arith.constant 0 : index
    %c0_0 = arith.constant 0 : index
    %0 = vector.load %arg0[%c0, %c0_0] : memref<8x32xf32, #tpu.memory_space<vmem>>, vector<8x32xf32>
    %1 = arith.truncf %0 : vector<8x32xf32> to vector<8x32xbf16>
    %c0_1 = arith.constant 0 : index
    %c0_2 = arith.constant 0 : index
    %2 = vector.load %arg2[%c0_1, %c0_2] : memref<496x128xbf16, #tpu.memory_space<vmem>>, vector<32x128xbf16>
    %cst = arith.constant dense<0.000000e+00> : vector<8x128xf32>
    %3 = tpu.matmul %1, %2, %cst {dimension_numbers = #tpu.dot_dimension_numbers<[1], [0], [0], [1], [0, 0, 1, 1], [], []>} : vector<8x32xbf16>, vector<32x128xbf16>, vector<8x128xf32> -> vector<8x128xf32>
    %c0_3 = arith.constant 0 : index
    %c0_4 = arith.constant 0 : index
    %4 = vector.load %arg1[%c0_3, %c0_4] : memref<8x4xf32, #tpu.memory_space<vmem>>, vector<8x4xf32>
    %5 = arith.truncf %4 : vector<8x4xf32> to vector<8x4xbf16>
    %c32 = arith.constant 32 : index
    %c0_5 = arith.constant 0 : index
    %6 = vector.load %arg2[%c32, %c0_5] : memref<496x128xbf16, #tpu.memory_space<vmem>>, vector<4x128xbf16>
    %cst_6 = arith.constant dense<0.000000e+00> : vector<8x128xf32>
    %7 = tpu.matmul %5, %6, %cst_6 {dimension_numbers = #tpu.dot_dimension_numbers<[1], [0], [0], [1], [0, 0, 1, 1], [], []>} : vector<8x4xbf16>, vector<4x128xbf16>, vector<8x128xf32> -> vector<8x128xf32>
    %8 = arith.addf %3, %7 : vector<8x128xf32>
    %c48 = arith.constant 48 : index
    %c0_7 = arith.constant 0 : index
    %9 = vector.load %arg2[%c48, %c0_7] : memref<496x128xbf16, #tpu.memory_space<vmem>>, vector<1x128xbf16>
    %10 = arith.extf %9 : vector<1x128xbf16> to vector<1x128xf32>
    %11 = vector.broadcast %10 : vector<1x128xf32> to vector<8x128xf32>
    %12 = arith.addf %8, %11 : vector<8x128xf32>
    %cst_8 = arith.constant 0.000000e+00 : f32
    %13 = vector.broadcast %cst_8 : f32 to vector<8x128xf32>
    %14 = arith.maximumf %12, %13 : vector<8x128xf32>
    %15 = arith.truncf %14 : vector<8x128xf32> to vector<8x128xbf16>
    %c64 = arith.constant 64 : index
    %c0_9 = arith.constant 0 : index
    %16 = vector.load %arg2[%c64, %c0_9] : memref<496x128xbf16, #tpu.memory_space<vmem>>, vector<128x128xbf16>
    %cst_10 = arith.constant dense<0.000000e+00> : vector<8x128xf32>
    %17 = tpu.matmul %15, %16, %cst_10 {dimension_numbers = #tpu.dot_dimension_numbers<[1], [0], [0], [1], [0, 0, 1, 1], [], []>} : vector<8x128xbf16>, vector<128x128xbf16>, vector<8x128xf32> -> vector<8x128xf32>
    %c192 = arith.constant 192 : index
    %c0_11 = arith.constant 0 : index
    %18 = vector.load %arg2[%c192, %c0_11] : memref<496x128xbf16, #tpu.memory_space<vmem>>, vector<1x128xbf16>
    %19 = arith.extf %18 : vector<1x128xbf16> to vector<1x128xf32>
    %20 = vector.broadcast %19 : vector<1x128xf32> to vector<8x128xf32>
    %21 = arith.addf %17, %20 : vector<8x128xf32>
    %cst_12 = arith.constant 0.000000e+00 : f32
    %22 = vector.broadcast %cst_12 : f32 to vector<8x128xf32>
    %23 = arith.maximumf %21, %22 : vector<8x128xf32>
    %24 = arith.truncf %23 : vector<8x128xf32> to vector<8x128xbf16>
    %c208 = arith.constant 208 : index
    %c0_13 = arith.constant 0 : index
    %25 = vector.load %arg2[%c208, %c0_13] : memref<496x128xbf16, #tpu.memory_space<vmem>>, vector<128x128xbf16>
    %cst_14 = arith.constant dense<0.000000e+00> : vector<8x128xf32>
    %26 = tpu.matmul %24, %25, %cst_14 {dimension_numbers = #tpu.dot_dimension_numbers<[1], [0], [0], [1], [0, 0, 1, 1], [], []>} : vector<8x128xbf16>, vector<128x128xbf16>, vector<8x128xf32> -> vector<8x128xf32>
    %c336 = arith.constant 336 : index
    %c0_15 = arith.constant 0 : index
    %27 = vector.load %arg2[%c336, %c0_15] : memref<496x128xbf16, #tpu.memory_space<vmem>>, vector<1x128xbf16>
    %28 = arith.extf %27 : vector<1x128xbf16> to vector<1x128xf32>
    %29 = vector.broadcast %28 : vector<1x128xf32> to vector<8x128xf32>
    %30 = arith.addf %26, %29 : vector<8x128xf32>
    %cst_16 = arith.constant 0.000000e+00 : f32
    %31 = vector.broadcast %cst_16 : f32 to vector<8x128xf32>
    %32 = arith.maximumf %30, %31 : vector<8x128xf32>
    %33 = arith.truncf %32 : vector<8x128xf32> to vector<8x128xbf16>
    %c352 = arith.constant 352 : index
    %c0_17 = arith.constant 0 : index
    %34 = vector.load %arg2[%c352, %c0_17] : memref<496x128xbf16, #tpu.memory_space<vmem>>, vector<128x50xbf16>
    %cst_18 = arith.constant dense<0.000000e+00> : vector<8x50xf32>
    %35 = tpu.matmul %33, %34, %cst_18 {dimension_numbers = #tpu.dot_dimension_numbers<[1], [0], [0], [1], [0, 0, 1, 1], [], []>} : vector<8x128xbf16>, vector<128x50xbf16>, vector<8x50xf32> -> vector<8x50xf32>
    %c480 = arith.constant 480 : index
    %c0_19 = arith.constant 0 : index
    %36 = vector.load %arg2[%c480, %c0_19] : memref<496x128xbf16, #tpu.memory_space<vmem>>, vector<1x50xbf16>
    %37 = arith.extf %36 : vector<1x50xbf16> to vector<1x50xf32>
    %38 = vector.broadcast %37 : vector<1x50xf32> to vector<8x50xf32>
    %39 = arith.addf %35, %38 : vector<8x50xf32>
    %c0_20 = arith.constant 0 : index
    %c0_21 = arith.constant 0 : index
    %40 = vector.load %arg3[%c0_20, %c0_21] : memref<8x50xf32, #tpu.memory_space<vmem>>, vector<8x50xf32>
    tpu.vector_store %arg3[%c0_20, %c0_21], %39 {strides = array<i32>} : memref<8x50xf32, #tpu.memory_space<vmem>>, vector<8x50xf32>,
    return
  }
}

</mosaic_0001>

<llo_original>
// kernel: tpu_custom_call.1
$region0: #{tpu_custom_call.1}
  #allocation0 [shape = 'u32[]', space=smem, size = 0x4, offset = 0x4, fixed_abs, tag = 'smem constant byte address 0x4 - core index']
  #allocation1 [shape = 'u32[144,128]{1,0:T(1,128)}', space=vmem, size = 0x12000, scoped, tag = 'internal scratch']
  %s0 = inlined_call_operand.vmem [shape: f32[8,32], index: 0, kind: input, shape index: {}]
  %s1 = inlined_call_operand.vmem [shape: f32[8,4], index: 1, kind: input, shape index: {}]
  %s2 = inlined_call_operand.hbm [shape: bf16[496,128], index: 2, kind: input, shape index: {}]
  %s3 = inlined_call_operand.hbm [shape: f32[8,50], index: 3, kind: output, shape index: {}]
  %s4 = sld [smem:[#allocation0]]
  $region26: #{tpu_custom_call.1} parent=0
    _
  %s6 = ssub.s32 1, %s4
  %s7 = scalar_select 0, %s6, %s4
  $region1: #{tpu_custom_call.1} parent=0
    #allocation2 [shape = 'u8[126976]{0}', space=vmem, size = 0x1f000, scoped, tag = 'input window, operand 2, single buffered']
    #allocation3 [shape = 's32[1]{0}', space=sflag, size = 0x4, scoped, tag = 'scoped memory for tpu_custom_call.1']
    #allocation4 [shape = 's32[1]{0}', space=sflag, size = 0x4, scoped, tag = 'scoped memory for tpu_custom_call.1']
    #allocation5 [shape = 'u8[4096]{0}', space=vmem, size = 0x1000, scoped, tag = 'output window, operand 0, single buffered']
    %8 = vsyncpa [#allocation3], 0
    %9 = vsyncpa [#allocation4], 0
    // Predicated region
    $region2: #{tpu_custom_call.1} parent=1 // pred_check
      _
    $region3: #{tpu_custom_call.1} parent=1 // pred_check_branch
      %11 = sbr.rel (0) target = $region5
    $region4: #{tpu_custom_call.1} parent=1 // pred_region
      _
    $region5: #{tpu_custom_call.1} parent=1 // pred_fallthru
      _
    // Predicated region
    $region6: #{tpu_custom_call.1} parent=1 // pred_check
      _
    $region7: #{tpu_custom_call.1} parent=1 // pred_check_branch
      %13 = sbr.rel (0) target = $region9
    $region8: #{tpu_custom_call.1} parent=1 // pred_region
      _
    $region9: #{tpu_custom_call.1} parent=1 // pred_fallthru
      _
    // Predicated region
    $region10: #{tpu_custom_call.1} parent=1 // pred_check
      _
    $region11: #{tpu_custom_call.1} parent=1 // pred_check_branch
      %15 = sbr.rel (0) target = $region13
    $region12: #{tpu_custom_call.1} parent=1 // pred_region
      %s17 = ssub.s32 3968, 3968
      %18 = vsyncadd [#allocation3], %s17
      %s19 = sshll.u32 [#allocation2], 4
      %s20 = int_to_ptr.vmem [resolvable:$true] %s19
      %25 = dma.hbm_to_vmem [thread:$0]  %s2, 3968, %s20, [#allocation3], 64, 64, 4
    $region13: #{tpu_custom_call.1} parent=1 // pred_fallthru
      _
    // Predicated region
    $region14: #{tpu_custom_call.1} parent=1 // pred_check
      _
    $region15: #{tpu_custom_call.1} parent=1 // pred_check_branch
      %27 = sbr.rel (0) target = $region17
    $region16: #{tpu_custom_call.1} parent=1 // pred_region
      %28 = dma.done [#allocation3], 3968
    $region17: #{tpu_custom_call.1} parent=1 // pred_fallthru
      _
    %v30 = vld [vmem:[%s0] sm:$0xff]
    %v31 = vpack.c.bf16 %v30, %v30
    %v32 = vld [vmem:[#allocation2] sm:$0xf]
    %v33 = vld [vmem:[#allocation2 + $0x4] sm:$0xf]
    %v34 = vld [vmem:[#allocation2 + $0x8] sm:$0xf]
    %v35 = vld [vmem:[#allocation2 + $0xc] sm:$0xf]
    %v36 = vld [vmem:[%s1] sm:$0xff]
    %v37 = vpack.c.bf16 %v36, %v36
    %v38 = vld [vmem:[#allocation2 + $0x10] sm:$0x3]
    %vm39 = vcmask 31744
    %v41 = vsel %vm39, %v37, 0
    %vm43 = vcmask 1041408
    %v45 = vsel %vm43, %v38, 0
    %47 = vmatprep.subr.bf16.mxu0 0
    %48 = vmatpush1.bf16.msra.mxu0 %v45
    %49 = vmatprep.subr.bf16.mxu0 0
    %50 = vmatpush1.bf16.msra.mxu0 0
    %51 = vmatprep.subr.bf16.mxu0 0
    %52 = vmatpush1.bf16.msra.mxu0 0
    %53 = vmatprep.subr.bf16.mxu0 0
    %54 = vmatpush1.bf16.msra.mxu0 0
    %55 = vmatprep.subr.bf16.mxu0 0
    %56 = vmatpush1.bf16.msra.mxu0 0
    %57 = vmatprep.subr.bf16.mxu0 0
    %58 = vmatpush1.bf16.msra.mxu0 0
    %59 = vmatprep.subr.bf16.mxu0 0
    %60 = vmatpush1.bf16.msra.mxu0 0
    %61 = vmatprep.subr.bf16.mxu0 0
    %62 = vmatpush1.bf16.msra.mxu0 0
    %63 = vmatprep.subr.bf16.mxu0 0
    %64 = vmatpush1.bf16.msra.mxu0 0
    %65 = vmatprep.subr.bf16.mxu0 0
    %66 = vmatpush1.bf16.msra.mxu0 0
    %67 = vmatprep.subr.bf16.mxu0 0
    %68 = vmatpush1.bf16.msra.mxu0 0
    %69 = vmatprep.subr.bf16.mxu0 0
    %70 = vmatpush1.bf16.msra.mxu0 0
    %71 = vmatprep.subr.bf16.mxu0 0
    %72 = vmatpush1.bf16.msra.mxu0 0
    %73 = vmatprep.subr.bf16.mxu0 0
    %74 = vmatpush1.bf16.msra.mxu0 0
    %75 = vmatprep.subr.bf16.mxu0 0
    %76 = vmatpush1.bf16.msra.mxu0 0
    %77 = vmatprep.subr.bf16.mxu0 0
    %78 = vmatpush1.bf16.msra.mxu0 0
    %79 = vmatprep.mubr.bf16.mxu0 0
    %80 = vmatmul.mubr.bf16.gmra.mrb[0].mxu0 %v41
    %v81 = vpop.f32.mrb[0].mxu0
    %v82 = vadd.f32 0.0, %v81
    %v83 = vpop.f32.mrb[0].mxu0
    %v84 = vpop.f32.mrb[0].mxu0
    %v85 = vpop.f32.mrb[0].mxu0
    %86 = vdwg.mxu0
    %v91 = vunpack.c.l.b16 %v32
    %v92 = vunpack.c.l.b16 %v33
    %v93 = vunpack.c.l.b16 %v34
    %v94 = vunpack.c.l.b16 %v35
    %v95 = vpack.c.b16 %v92, %v91
    %v96 = vpack.c.b16 %v94, %v93
    %vm99 = vcmask 261120
    %v101 = vsel %vm99, %v31, 0
    %103 = vmatprep.subr.bf16.mxu0 0
    %104 = vmatpush1.bf16.msra.mxu0 %v95
    %105 = vmatprep.subr.bf16.mxu0 0
    %106 = vmatpush1.bf16.msra.mxu0 %v96
    %107 = vmatprep.subr.bf16.mxu0 0
    %108 = vmatpush1.bf16.msra.mxu0 0
    %109 = vmatprep.subr.bf16.mxu0 0
    %110 = vmatpush1.bf16.msra.mxu0 0
    %111 = vmatprep.subr.bf16.mxu0 0
    %112 = vmatpush1.bf16.msra.mxu0 0
    %113 = vmatprep.subr.bf16.mxu0 0
    %114 = vmatpush1.bf16.msra.mxu0 0
    %115 = vmatprep.subr.bf16.mxu0 0
    %116 = vmatpush1.bf16.msra.mxu0 0
    %117 = vmatprep.subr.bf16.mxu0 0
    %118 = vmatpush1.bf16.msra.mxu0 0
    %119 = vmatprep.subr.bf16.mxu0 0
    %120 = vmatpush1.bf16.msra.mxu0 0
    %121 = vmatprep.subr.bf16.mxu0 0
    %122 = vmatpush1.bf16.msra.mxu0 0
    %123 = vmatprep.subr.bf16.mxu0 0
    %124 = vmatpush1.bf16.msra.mxu0 0
    %125 = vmatprep.subr.bf16.mxu0 0
    %126 = vmatpush1.bf16.msra.mxu0 0
    %127 = vmatprep.subr.bf16.mxu0 0
    %128 = vmatpush1.bf16.msra.mxu0 0
    %129 = vmatprep.subr.bf16.mxu0 0
    %130 = vmatpush1.bf16.msra.mxu0 0
    %131 = vmatprep.subr.bf16.mxu0 0
    %132 = vmatpush1.bf16.msra.mxu0 0
    %133 = vmatprep.subr.bf16.mxu0 0
    %134 = vmatpush1.bf16.msra.mxu0 0
    %135 = vmatprep.mubr.bf16.mxu0 0
    %136 = vmatmul.mubr.bf16.gmra.mrb[0].mxu0 %v101
    %v137 = vpop.f32.mrb[0].mxu0
    %v138 = vadd.f32 %v82, %v137
    %v139 = vpop.f32.mrb[0].mxu0
    %v140 = vpop.f32.mrb[0].mxu0
    %v141 = vpop.f32.mrb[0].mxu0
    %142 = vdwg.mxu0
    %v143 = vld [vmem:[#allocation2 + $0x18] sm:$0x1]
    %v144 = vunpack.c.l.bf16 %v143
    %v145 = vlaneseq
    %v146 = vshrl.u32 %v145, 7
    %v147 = vsub.s32 0, %v146
    %v148 = vrot.slane %v144, %v147
    %v149 = vadd.f32 %v138, %v148
    %v150 = vmax.f32 %v149, 0.0
    %v151 = vpack.c.bf16 %v150, %v150
    %v152 = vld [vmem:[#allocation2 + $0x20] sm:$0xf]
    %v153 = vld [vmem:[#allocation2 + $0x24] sm:$0xf]
    %v154 = vld [vmem:[#allocation2 + $0x28] sm:$0xf]
    %v155 = vld [vmem:[#allocation2 + $0x2c] sm:$0xf]
    %v156 = vld [vmem:[#allocation2 + $0x30] sm:$0xf]
    %v157 = vld [vmem:[#allocation2 + $0x34] sm:$0xf]
    %v158 = vld [vmem:[#allocation2 + $0x38] sm:$0xf]
    %v159 = vld [vmem:[#allocation2 + $0x3c] sm:$0xf]
    %v160 = vld [vmem:[#allocation2 + $0x40] sm:$0xf]
    %v161 = vld [vmem:[#allocation2 + $0x44] sm:$0xf]
    %v162 = vld [vmem:[#allocation2 + $0x48] sm:$0xf]
    %v163 = vld [vmem:[#allocation2 + $0x4c] sm:$0xf]
    %v164 = vld [vmem:[#allocation2 + $0x50] sm:$0xf]
    %v165 = vld [vmem:[#allocation2 + $0x54] sm:$0xf]
    %v166 = vld [vmem:[#allocation2 + $0x58] sm:$0xf]
    %v167 = vld [vmem:[#allocation2 + $0x5c] sm:$0xf]
    %v168 = vld [vmem:[#allocation2 + $0x60] sm:$0x1]
    %v169 = vunpack.c.l.bf16 %v168
    %v170 = vlaneseq
    %v171 = vshrl.u32 %v170, 7
    %v172 = vsub.s32 0, %v171
    %v173 = vrot.slane %v169, %v172
    %v190 = vunpack.c.l.b16 %v152
    %v191 = vunpack.c.l.b16 %v153
    %v192 = vunpack.c.l.b16 %v154
    %v193 = vunpack.c.l.b16 %v155
    %v194 = vunpack.c.l.b16 %v156
    %v195 = vunpack.c.l.b16 %v157
    %v196 = vunpack.c.l.b16 %v158
    %v197 = vunpack.c.l.b16 %v159
    %v198 = vunpack.c.l.b16 %v160
    %v199 = vunpack.c.l.b16 %v161
    %v200 = vunpack.c.l.b16 %v162
    %v201 = vunpack.c.l.b16 %v163
    %v202 = vunpack.c.l.b16 %v164
    %v203 = vunpack.c.l.b16 %v165
    %v204 = vunpack.c.l.b16 %v166
    %v205 = vunpack.c.l.b16 %v167
    %v206 = vpack.c.b16 %v191, %v190
    %v207 = vpack.c.b16 %v193, %v192
    %v208 = vpack.c.b16 %v195, %v194
    %v209 = vpack.c.b16 %v197, %v196
    %v210 = vpack.c.b16 %v199, %v198
    %v211 = vpack.c.b16 %v201, %v200
    %v212 = vpack.c.b16 %v203, %v202
    %v213 = vpack.c.b16 %v205, %v204
    %222 = vmatprep.subr.bf16.mxu0 0
    %223 = vmatpush1.bf16.msra.mxu0 %v206
    %224 = vmatprep.subr.bf16.mxu0 0
    %225 = vmatpush1.bf16.msra.mxu0 %v207
    %226 = vmatprep.subr.bf16.mxu0 0
    %227 = vmatpush1.bf16.msra.mxu0 %v208
    %228 = vmatprep.subr.bf16.mxu0 0
    %229 = vmatpush1.bf16.msra.mxu0 %v209
    %230 = vmatprep.subr.bf16.mxu0 0
    %231 = vmatpush1.bf16.msra.mxu0 %v210
    %232 = vmatprep.subr.bf16.mxu0 0
    %233 = vmatpush1.bf16.msra.mxu0 %v211
    %234 = vmatprep.subr.bf16.mxu0 0
    %235 = vmatpush1.bf16.msra.mxu0 %v212
    %236 = vmatprep.subr.bf16.mxu0 0
    %237 = vmatpush1.bf16.msra.mxu0 %v213
    %238 = vmatprep.subr.bf16.mxu0 0
    %239 = vmatpush1.bf16.msra.mxu0 0
    %240 = vmatprep.subr.bf16.mxu0 0
    %241 = vmatpush1.bf16.msra.mxu0 0
    %242 = vmatprep.subr.bf16.mxu0 0
    %243 = vmatpush1.bf16.msra.mxu0 0
    %244 = vmatprep.subr.bf16.mxu0 0
    %245 = vmatpush1.bf16.msra.mxu0 0
    %246 = vmatprep.subr.bf16.mxu0 0
    %247 = vmatpush1.bf16.msra.mxu0 0
    %248 = vmatprep.subr.bf16.mxu0 0
    %249 = vmatpush1.bf16.msra.mxu0 0
    %250 = vmatprep.subr.bf16.mxu0 0
    %251 = vmatpush1.bf16.msra.mxu0 0
    %252 = vmatprep.subr.bf16.mxu0 0
    %253 = vmatpush1.bf16.msra.mxu0 0
    %254 = vmatprep.mubr.bf16.mxu0 0
    %255 = vmatmul.mubr.bf16.gmra.mrb[0].mxu0 %v151
    %v256 = vpop.f32.mrb[0].mxu0
    %v257 = vadd.f32 %v173, %v256
    %v258 = vpop.f32.mrb[0].mxu0
    %v259 = vpop.f32.mrb[0].mxu0
    %v260 = vpop.f32.mrb[0].mxu0
    %261 = vdwg.mxu0
    %v262 = vmax.f32 %v257, 0.0
    %v263 = vpack.c.bf16 %v262, %v262
    %v264 = vld [vmem:[#allocation2 + $0x68] sm:$0xf]
    %v265 = vld [vmem:[#allocation2 + $0x6c] sm:$0xf]
    %v266 = vld [vmem:[#allocation2 + $0x70] sm:$0xf]
    %v267 = vld [vmem:[#allocation2 + $0x74] sm:$0xf]
    %v268 = vld [vmem:[#allocation2 + $0x78] sm:$0xf]
    %v269 = vld [vmem:[#allocation2 + $0x7c] sm:$0xf]
    %v270 = vld [vmem:[#allocation2 + $0x80] sm:$0xf]
    %v271 = vld [vmem:[#allocation2 + $0x84] sm:$0xf]
    %v272 = vld [vmem:[#allocation2 + $0x88] sm:$0xf]
    %v273 = vld [vmem:[#allocation2 + $0x8c] sm:$0xf]
    %v274 = vld [vmem:[#allocation2 + $0x90] sm:$0xf]
    %v275 = vld [vmem:[#allocation2 + $0x94] sm:$0xf]
    %v276 = vld [vmem:[#allocation2 + $0x98] sm:$0xf]
    %v277 = vld [vmem:[#allocation2 + $0x9c] sm:$0xf]
    %v278 = vld [vmem:[#allocation2 + $0xa0] sm:$0xf]
    %v279 = vld [vmem:[#allocation2 + $0xa4] sm:$0xf]
    %v280 = vld [vmem:[#allocation2 + $0xa8] sm:$0x1]
    %v281 = vunpack.c.l.bf16 %v280
    %v282 = vlaneseq
    %v283 = vshrl.u32 %v282, 7
    %v284 = vsub.s32 0, %v283
    %v285 = vrot.slane %v281, %v284
    %v302 = vunpack.c.l.b16 %v264
    %v303 = vunpack.c.l.b16 %v265
    %v304 = vunpack.c.l.b16 %v266
    %v305 = vunpack.c.l.b16 %v267
    %v306 = vunpack.c.l.b16 %v268
    %v307 = vunpack.c.l.b16 %v269
    %v308 = vunpack.c.l.b16 %v270
    %v309 = vunpack.c.l.b16 %v271
    %v310 = vunpack.c.l.b16 %v272
    %v311 = vunpack.c.l.b16 %v273
    %v312 = vunpack.c.l.b16 %v274
    %v313 = vunpack.c.l.b16 %v275
    %v314 = vunpack.c.l.b16 %v276
    %v315 = vunpack.c.l.b16 %v277
    %v316 = vunpack.c.l.b16 %v278
    %v317 = vunpack.c.l.b16 %v279
    %v318 = vpack.c.b16 %v303, %v302
    %v319 = vpack.c.b16 %v305, %v304
    %v320 = vpack.c.b16 %v307, %v306
    %v321 = vpack.c.b16 %v309, %v308
    %v322 = vpack.c.b16 %v311, %v310
    %v323 = vpack.c.b16 %v313, %v312
    %v324 = vpack.c.b16 %v315, %v314
    %v325 = vpack.c.b16 %v317, %v316
    %334 = vmatprep.subr.bf16.mxu0 0
    %335 = vmatpush1.bf16.msra.mxu0 %v318
    %336 = vmatprep.subr.bf16.mxu0 0
    %337 = vmatpush1.bf16.msra.mxu0 %v319
    %338 = vmatprep.subr.bf16.mxu0 0
    %339 = vmatpush1.bf16.msra.mxu0 %v320
    %340 = vmatprep.subr.bf16.mxu0 0
    %341 = vmatpush1.bf16.msra.mxu0 %v321
    %342 = vmatprep.subr.bf16.mxu0 0
    %343 = vmatpush1.bf16.msra.mxu0 %v322
    %344 = vmatprep.subr.bf16.mxu0 0
    %345 = vmatpush1.bf16.msra.mxu0 %v323
    %346 = vmatprep.subr.bf16.mxu0 0
    %347 = vmatpush1.bf16.msra.mxu0 %v324
    %348 = vmatprep.subr.bf16.mxu0 0
    %349 = vmatpush1.bf16.msra.mxu0 %v325
    %350 = vmatprep.subr.bf16.mxu0 0
    %351 = vmatpush1.bf16.msra.mxu0 0
    %352 = vmatprep.subr.bf16.mxu0 0
    %353 = vmatpush1.bf16.msra.mxu0 0
    %354 = vmatprep.subr.bf16.mxu0 0
    %355 = vmatpush1.bf16.msra.mxu0 0
    %356 = vmatprep.subr.bf16.mxu0 0
    %357 = vmatpush1.bf16.msra.mxu0 0
    %358 = vmatprep.subr.bf16.mxu0 0
    %359 = vmatpush1.bf16.msra.mxu0 0
    %360 = vmatprep.subr.bf16.mxu0 0
    %361 = vmatpush1.bf16.msra.mxu0 0
    %362 = vmatprep.subr.bf16.mxu0 0
    %363 = vmatpush1.bf16.msra.mxu0 0
    %364 = vmatprep.subr.bf16.mxu0 0
    %365 = vmatpush1.bf16.msra.mxu0 0
    %366 = vmatprep.mubr.bf16.mxu0 0
    %367 = vmatmul.mubr.bf16.gmra.mrb[0].mxu0 %v263
    %v368 = vpop.f32.mrb[0].mxu0
    %v369 = vadd.f32 %v285, %v368
    %v370 = vpop.f32.mrb[0].mxu0
    %v371 = vpop.f32.mrb[0].mxu0
    %v372 = vpop.f32.mrb[0].mxu0
    %373 = vdwg.mxu0
    %v374 = vmax.f32 %v369, 0.0
    %v375 = vpack.c.bf16 %v374, %v374
    %v376 = vld [vmem:[#allocation2 + $0xb0] sm:$0xf]
    %v377 = vld [vmem:[#allocation2 + $0xb4] sm:$0xf]
    %v378 = vld [vmem:[#allocation2 + $0xb8] sm:$0xf]
    %v379 = vld [vmem:[#allocation2 + $0xbc] sm:$0xf]
    %v380 = vld [vmem:[#allocation2 + $0xc0] sm:$0xf]
    %v381 = vld [vmem:[#allocation2 + $0xc4] sm:$0xf]
    %v382 = vld [vmem:[#allocation2 + $0xc8] sm:$0xf]
    %v383 = vld [vmem:[#allocation2 + $0xcc] sm:$0xf]
    %v384 = vld [vmem:[#allocation2 + $0xd0] sm:$0xf]
    %v385 = vld [vmem:[#allocation2 + $0xd4] sm:$0xf]
    %v386 = vld [vmem:[#allocation2 + $0xd8] sm:$0xf]
    %v387 = vld [vmem:[#allocation2 + $0xdc] sm:$0xf]
    %v388 = vld [vmem:[#allocation2 + $0xe0] sm:$0xf]
    %v389 = vld [vmem:[#allocation2 + $0xe4] sm:$0xf]
    %v390 = vld [vmem:[#allocation2 + $0xe8] sm:$0xf]
    %v391 = vld [vmem:[#allocation2 + $0xec] sm:$0xf]
    %v392 = vld [vmem:[#allocation2 + $0xf0] sm:$0x1]
    %v393 = vunpack.c.l.bf16 %v392
    %v394 = vlaneseq
    %v395 = vshrl.u32 %v394, 7
    %v396 = vsub.s32 0, %v395
    %v397 = vrot.slane %v393, %v396
    %v414 = vunpack.c.l.b16 %v376
    %v415 = vunpack.c.l.b16 %v377
    %v416 = vunpack.c.l.b16 %v378
    %v417 = vunpack.c.l.b16 %v379
    %v418 = vunpack.c.l.b16 %v380
    %v419 = vunpack.c.l.b16 %v381
    %v420 = vunpack.c.l.b16 %v382
    %v421 = vunpack.c.l.b16 %v383
    %v422 = vunpack.c.l.b16 %v384
    %v423 = vunpack.c.l.b16 %v385
    %v424 = vunpack.c.l.b16 %v386
    %v425 = vunpack.c.l.b16 %v387
    %v426 = vunpack.c.l.b16 %v388
    %v427 = vunpack.c.l.b16 %v389
    %v428 = vunpack.c.l.b16 %v390
    %v429 = vunpack.c.l.b16 %v391
    %v430 = vpack.c.b16 %v415, %v414
    %v431 = vpack.c.b16 %v417, %v416
    %v432 = vpack.c.b16 %v419, %v418
    %v433 = vpack.c.b16 %v421, %v420
    %v434 = vpack.c.b16 %v423, %v422
    %v435 = vpack.c.b16 %v425, %v424
    %v436 = vpack.c.b16 %v427, %v426
    %v437 = vpack.c.b16 %v429, %v428
    %446 = vmatprep.subr.bf16.mxu0 0
    %447 = vmatpush1.bf16.msra.mxu0 %v430
    %448 = vmatprep.subr.bf16.mxu0 0
    %449 = vmatpush1.bf16.msra.mxu0 %v431
    %450 = vmatprep.subr.bf16.mxu0 0
    %451 = vmatpush1.bf16.msra.mxu0 %v432
    %452 = vmatprep.subr.bf16.mxu0 0
    %453 = vmatpush1.bf16.msra.mxu0 %v433
    %454 = vmatprep.subr.bf16.mxu0 0
    %455 = vmatpush1.bf16.msra.mxu0 %v434
    %456 = vmatprep.subr.bf16.mxu0 0
    %457 = vmatpush1.bf16.msra.mxu0 %v435
    %458 = vmatprep.subr.bf16.mxu0 0
    %459 = vmatpush1.bf16.msra.mxu0 %v436
    %460 = vmatprep.subr.bf16.mxu0 0
    %461 = vmatpush1.bf16.msra.mxu0 %v437
    %462 = vmatprep.subr.bf16.mxu0 0
    %463 = vmatpush1.bf16.msra.mxu0 0
    %464 = vmatprep.subr.bf16.mxu0 0
    %465 = vmatpush1.bf16.msra.mxu0 0
    %466 = vmatprep.subr.bf16.mxu0 0
    %467 = vmatpush1.bf16.msra.mxu0 0
    %468 = vmatprep.subr.bf16.mxu0 0
    %469 = vmatpush1.bf16.msra.mxu0 0
    %470 = vmatprep.subr.bf16.mxu0 0
    %471 = vmatpush1.bf16.msra.mxu0 0
    %472 = vmatprep.subr.bf16.mxu0 0
    %473 = vmatpush1.bf16.msra.mxu0 0
    %474 = vmatprep.subr.bf16.mxu0 0
    %475 = vmatpush1.bf16.msra.mxu0 0
    %476 = vmatprep.subr.bf16.mxu0 0
    %477 = vmatpush1.bf16.msra.mxu0 0
    %478 = vmatprep.mubr.bf16.mxu0 0
    %479 = vmatmul.mubr.bf16.gmra.mrb[0].mxu0 %v375
    %v480 = vpop.f32.mrb[0].mxu0
    %v481 = vadd.f32 %v397, %v480
    %v482 = vpop.f32.mrb[0].mxu0
    %v483 = vpop.f32.mrb[0].mxu0
    %v484 = vpop.f32.mrb[0].mxu0
    %485 = vdwg.mxu0
    %vm486 = vcmask 408576
    %487 = vst.msk [vmem:[#allocation5] sm:$0xff] %vm486, %v481
    // Predicated region
    $region18: #{tpu_custom_call.1} parent=1 // pred_check
      _
    $region19: #{tpu_custom_call.1} parent=1 // pred_check_branch
      %489 = sbr.rel (0) target = $region21
    $region20: #{tpu_custom_call.1} parent=1 // pred_region
      %s491 = ssub.s32 128, 128
      %492 = vsyncadd [#allocation4], %s491
      %s494 = sshll.u32 [#allocation5], 4
      %s495 = int_to_ptr.vmem [resolvable:$true] %s494
      %497 = dma.vmem_to_hbm [thread:$0]  %s495, 128, %s3, [#allocation4]
    $region21: #{tpu_custom_call.1} parent=1 // pred_fallthru
      _
    // Predicated region
    $region22: #{tpu_custom_call.1} parent=1 // pred_check
      _
    $region23: #{tpu_custom_call.1} parent=1 // pred_check_branch
      %499 = sbr.rel (0) target = $region25
    $region24: #{tpu_custom_call.1} parent=1 // pred_region
      %500 = dma.done [#allocation4], 128
    $region25: #{tpu_custom_call.1} parent=1 // pred_fallthru
      _
    %501 = vsyncpa [#allocation3], 1
    %502 = vsyncpa [#allocation4], 1

</llo_original>
